<compile_context>
chip_gen: v5e
topology: v5e:2x2
jax: 0.10.0
libtpu: 0.0.40
codegen_flags: <defaults>
</compile_context>

<pallas_src>
import functools
import math

import jax
import jax.numpy as jnp
from jax.experimental import pallas as pl
from jax.experimental.pallas import tpu as pltpu


def _round_up(x, m):
    return ((x + m - 1) // m) * m


def _sublane_granule(dtype):
    # dtype-aware minimum sublane tile (f32: 8, bf16/f16: 16, int8/fp8: 32).
    return {4: 8, 2: 16, 1: 32}.get(jnp.dtype(dtype).itemsize, 8)


def _vmem_capacity_bytes():
    try:
        cap = int(getattr(pltpu.get_tpu_info(), "vmem_capacity_bytes", 0))
        if cap > 0:
            return cap
    except Exception:
        pass
    return 64 * 1024 * 1024  # conservative (v7x-sized) fallback


def _choose_tile(rows_out, B, K, PB, C_in, C_out, x_isz, w_isz, o_isz, g):
    """Pick (TM, HL, HR, vmem_limit): big blocks, halos rounded to the sublane
    granule, TM a multiple of lcm(HL, HR) so halo block indices are exact."""
    HL = _round_up(max(PB, 1), g)                    # left halo (>= padding*B)
    HR = _round_up(max((K - 1) * B - PB, 1), g)      # right halo
    L = math.lcm(HL, HR)                             # TM must be a multiple

    cap = _vmem_capacity_bytes()
    budget = max(8 << 20, min(int(cap * 0.45), 48 << 20))

    # bytes / output row: double-buffered input + window/slice temps (x dtype),
    # double-buffered output block, f32 accumulator + dot result.
    per_row = 6 * C_in * x_isz + 2 * C_out * o_isz + 8 * C_out
    fixed = (4 * (HL + HR) * C_in * x_isz
             + 2 * (K * C_in * C_out + C_out) * w_isz)

    tm = max((budget - fixed) // per_row, L)
    # keep at least two grid steps so v7x's two TensorCores both get work
    # (a 2-step grid costs <1us elsewhere).
    tm = min(tm, _round_up(pl.cdiv(rows_out, 2), L))
    tm = max((tm // L) * L, L)

    usage = fixed + per_row * tm
    vmem_limit = int(min(cap * 0.85, max(usage + (16 << 20), 32 << 20)))
    return int(tm), HL, HR, vmem_limit


def _conv_tbc_kernel(lh_ref, xm_ref, rh_ref, w_ref, b_ref, o_ref, *,
                     K, B, PB, HL, HR, TM, total_rows):
    # lh_ref: (HL, C_in)  rows [i*TM - HL, i*TM)          (intended)
    # xm_ref: (TM, C_in)  rows [i*TM, i*TM + TM)          (intended)
    # rh_ref: (HR, C_in)  rows [(i+1)*TM, (i+1)*TM + HR)  (intended)
    # w_ref : (K, C_in, C_out),  b_ref: (1, C_out),  o_ref: (TM, C_out)
    i = pl.program_id(0)
    C_out = o_ref.shape[-1]

    # Assemble the window and zero every row whose intended global row index
    # is outside [0, T*B).  This implements the left/right time zero-padding
    # and hides the stale bytes Pallas leaves in partially out-of-bounds edge
    # blocks (it only DMAs the valid part) and in clamped blocks.
    win = jnp.concatenate([lh_ref[...], xm_ref[...], rh_ref[...]], axis=0)
    W = HL + TM + HR
    row0 = i * TM - HL                                     # intended row of win[0]
    gidx = row0 + jax.lax.broadcasted_iota(jnp.int32, (W, 1), 0)
    win = jnp.where((gidx >= 0) & (gidx < total_rows), win, 0)

    # K unrolled shifted GEMMs, f32 accumulation (no lane-axis im2col concat).
    # Tap offsets are static; a row shift of k*B never crosses a batch row.
    acc = jnp.zeros((TM, C_out), jnp.float32)
    for k in range(K):
        c = HL + k * B - PB                                # static, >= 0
        acc = acc + jnp.dot(win[c:c + TM, :], w_ref[k],
                            preferred_element_type=jnp.float32)

    o_ref[...] = (acc + b_ref[...].astype(jnp.float32)).astype(o_ref.dtype)


def conv_tbc(x, weight, bias, padding=0):
    """x: (T, B, C_in), weight: (K, C_in, C_out), bias: (C_out,)."""
    T, B, C_in = x.shape
    K, wc_in, C_out = weight.shape
    assert wc_in == C_in, "weight C_in mismatch"
    T_out = T + 2 * padding - K + 1
    assert T_out > 0, "output time dimension must be positive"

    total_rows = T * B
    rows_out = T_out * B
    PB = padding * B

    x_isz = jnp.dtype(x.dtype).itemsize
    w_isz = jnp.dtype(weight.dtype).itemsize
    g = _sublane_granule(x.dtype)
    TM, HL, HR, vmem_limit = _choose_tile(
        rows_out, B, K, PB, C_in, C_out, x_isz, w_isz, x_isz, g)
    n_tiles = pl.cdiv(rows_out, TM)

    bpt_l = TM // HL
    bpt_r = TM // HR
    lh_last = max((total_rows - 1) // HL, 0)
    xm_last = max((total_rows - 1) // TM, 0)
    rh_last = max((total_rows - 1) // HR, 0)

    x_flat = x.reshape(total_rows, C_in)
    bias2d = bias.reshape(1, C_out)

    # Index maps are clamped to valid block indices.  Whenever the clamp
    # actually changes a block index, every row of that block is intended-
    # out-of-bounds and the kernel zeroes it, so the result is exact without
    # any wrapper-side zero padding of the activations (no extra HBM pass).
    in_specs = [
        pl.BlockSpec((HL, C_in),
                     lambda i: (jnp.clip(i * bpt_l - 1, 0, lh_last), 0)),
        pl.BlockSpec((TM, C_in),
                     lambda i: (jnp.minimum(i, xm_last), 0)),
        pl.BlockSpec((HR, C_in),
                     lambda i: (jnp.minimum((i + 1) * bpt_r, rh_last), 0)),
        pl.BlockSpec((K, C_in, C_out), lambda i: (0, 0, 0)),
        pl.BlockSpec((1, C_out), lambda i: (0, 0)),
    ]

    cost = pl.CostEstimate(
        flops=2 * rows_out * K * C_in * C_out,
        transcendentals=0,
        bytes_accessed=int(
            (total_rows + n_tiles * (HL + HR)) * C_in * x_isz
            + rows_out * C_out * x_isz
            + (K * C_in * C_out + C_out) * w_isz))

    kernel = functools.partial(_conv_tbc_kernel, K=K, B=B, PB=PB,
                               HL=HL, HR=HR, TM=TM, total_rows=total_rows)

    out_flat = pl.pallas_call(
        kernel,
        out_shape=jax.ShapeDtypeStruct((rows_out, C_out), x.dtype),
        grid=(n_tiles,),
        in_specs=in_specs,
        out_specs=pl.BlockSpec((TM, C_out), lambda i: (i, 0)),
        compiler_params=pltpu.CompilerParams(
            dimension_semantics=("parallel",),
            vmem_limit_bytes=vmem_limit),
        cost_estimate=cost,
    )(x_flat, x_flat, x_flat, weight, bias2d)

    return out_flat.reshape(T_out, B, C_out)


def conv_tbc_reference(x, weight, bias, padding=0):
    """Pure-JAX reference of torch's conv_tbc semantics."""
    T, B, C_in = x.shape
    K, _, C_out = weight.shape
    T_out = T + 2 * padding - K + 1
    xp = jnp.pad(x, ((padding, padding), (0, 0), (0, 0)))
    out = jnp.broadcast_to(bias, (T_out, B, C_out)).astype(jnp.float32)
    for k in range(K):
        out = out + jnp.einsum("tbc,co->tbo", xp[k:k + T_out], weight[k],
                               preferred_element_type=jnp.float32)
    return out.astype(x.dtype)


if __name__ == "__main__":
    key = jax.random.PRNGKey(0)

    # Case 1: module-sized problem ConvTBC(32, 32, kernel_size=3, padding=1).
    in_channels, out_channels, kernel_size, padding = 32, 32, 3, 1
    T, B = 8, 2
    kx, kw, kb = jax.random.split(key, 3)
    x = jax.random.normal(kx, (T, B, in_channels), dtype=jnp.float32)
    weight = jax.random.normal(
        kw, (kernel_size, in_channels, out_channels), dtype=jnp.float32) * 0.1
    bias = jax.random.normal(kb, (out_channels,), dtype=jnp.float32) * 0.1

    out = jax.block_until_ready(conv_tbc(x, weight, bias, padding))
    ref = conv_tbc_reference(x, weight, bias, padding)
    assert out.shape == (T + 2 * padding - kernel_size + 1, B, out_channels)
    assert jnp.allclose(out, ref, atol=1e-3, rtol=1e-3), "mismatch vs reference"

    # Case 2: larger problem exercising the multi-tile grid, cross-tile halos,
    # in-kernel left/right padding and the ragged last output block.
    T2, B2 = 1029, 4
    kx2, kw2, kb2 = jax.random.split(jax.random.PRNGKey(1), 3)
    x2 = jax.random.normal(kx2, (T2, B2, in_channels), dtype=jnp.float32)
    w2 = jax.random.normal(
        kw2, (kernel_size, in_channels, out_channels), dtype=jnp.float32) * 0.1
    b2 = jax.random.normal(kb2, (out_channels,), dtype=jnp.float32) * 0.1

    out2 = jax.block_until_ready(conv_tbc(x2, w2, b2, padding))
    ref2 = conv_tbc_reference(x2, w2, b2, padding)
    assert out2.shape == ref2.shape
    assert jnp.allclose(out2, ref2, atol=1e-3, rtol=1e-3), "mismatch (tiled)"

    # Case 3: padding = kernel_size - 1 (output longer than input), exercising
    # the clamped halo / main blocks at both ends.
    T3, B3, pad3 = 37, 2, kernel_size - 1
    kx3, kw3, kb3 = jax.random.split(jax.random.PRNGKey(2), 3)
    x3 = jax.random.normal(kx3, (T3, B3, in_channels), dtype=jnp.float32)
    w3 = jax.random.normal(
        kw3, (kernel_size, in_channels, out_channels), dtype=jnp.float32) * 0.1
    b3 = jax.random.normal(kb3, (out_channels,), dtype=jnp.float32) * 0.1

    out3 = jax.block_until_ready(conv_tbc(x3, w3, b3, pad3))
    ref3 = conv_tbc_reference(x3, w3, b3, pad3)
    assert out3.shape == ref3.shape
    assert jnp.allclose(out3, ref3, atol=1e-3, rtol=1e-3), "mismatch (pad=K-1)"

    print("KERNEL_OK")
</pallas_src>

<mosaic_0001>
module attributes {stable_mosaic.version = 11 : i64} {
  func.func @_conv_tbc_kernel(%arg0: i32, %arg1: memref<8x32xf32, #tpu.memory_space<vmem>>, %arg2: memref<8x32xf32, #tpu.memory_space<vmem>>, %arg3: memref<8x32xf32, #tpu.memory_space<vmem>>, %arg4: memref<3x32x32xf32, #tpu.memory_space<vmem>>, %arg5: memref<1x32xf32, #tpu.memory_space<vmem>>, %arg6: memref<8x32xf32, #tpu.memory_space<vmem>>) attributes {dimension_semantics = [#tpu.dimension_semantics<parallel>], iteration_bounds = array<i64: 2>, scalar_prefetch = 0 : i64, scratch_operands = 0 : i64, tpu.core_type = #tpu.core_type<tc>, window_params = [{transform_indices = @transform_0, window_bounds = array<i64: 8, 32>}, {transform_indices = @transform_1, window_bounds = array<i64: 8, 32>}, {transform_indices = @transform_2, window_bounds = array<i64: 8, 32>}, {pipeline_mode = #tpu.pipeline_mode<synchronous>, transform_indices = @transform_3, window_bounds = array<i64: 3, 32, 32>}, {pipeline_mode = #tpu.pipeline_mode<synchronous>, transform_indices = @transform_4, window_bounds = array<i64: 1, 32>}, {transform_indices = @transform_5, window_bounds = array<i64: 8, 32>}]} {
    %c0 = arith.constant 0 : index
    %c0_0 = arith.constant 0 : index
    %0 = vector.load %arg1[%c0, %c0_0] : memref<8x32xf32, #tpu.memory_space<vmem>>, vector<8x32xf32>
    %c0_1 = arith.constant 0 : index
    %c0_2 = arith.constant 0 : index
    %1 = vector.load %arg2[%c0_1, %c0_2] : memref<8x32xf32, #tpu.memory_space<vmem>>, vector<8x32xf32>
    %c0_3 = arith.constant 0 : index
    %c0_4 = arith.constant 0 : index
    %2 = vector.load %arg3[%c0_3, %c0_4] : memref<8x32xf32, #tpu.memory_space<vmem>>, vector<8x32xf32>
    %3 = tpu.concatenate %0, %1, %2 in 0 : vector<8x32xf32>, vector<8x32xf32>, vector<8x32xf32> -> vector<24x32xf32>
    %c8_i32 = arith.constant 8 : i32
    %4 = arith.muli %arg0, %c8_i32 : i32
    %c8_i32_5 = arith.constant 8 : i32
    %5 = arith.subi %4, %c8_i32_5 : i32
    %6 = tpu.iota {dimensions = array<i32: 0>} : vector<24x1xi32>
    %7 = vector.broadcast %5 : i32 to vector<24x1xi32>
    %8 = arith.addi %7, %6 : vector<24x1xi32>
    %c0_i32 = arith.constant 0 : i32
    %9 = vector.broadcast %c0_i32 : i32 to vector<24x1xi32>
    %10 = arith.cmpi sge, %8, %9 : vector<24x1xi32>
    %c16_i32 = arith.constant 16 : i32
    %11 = vector.broadcast %c16_i32 : i32 to vector<24x1xi32>
    %12 = arith.cmpi slt, %8, %11 : vector<24x1xi32>
    %13 = arith.andi %10, %12 : vector<24x1xi1>
    %c0_i32_6 = arith.constant 0 : i32
    %14 = arith.sitofp %c0_i32_6 : i32 to f32
    %15 = vector.shape_cast %13 : vector<24x1xi1> to vector<24x1xi1>
    %16 = vector.broadcast %15 : vector<24x1xi1> to vector<24x32xi1>
    %17 = vector.broadcast %14 : f32 to vector<24x32xf32>
    %18 = arith.select %16, %3, %17 : vector<24x32xi1>, vector<24x32xf32>
    %cst = arith.constant 0.000000e+00 : f32
    %19 = vector.broadcast %cst : f32 to vector<8x32xf32>
    %20 = vector.extract_strided_slice %18 {offsets = [6, 0], sizes = [8, 32], strides = [1, 1]} : vector<24x32xf32> to vector<8x32xf32>
    %c0_7 = arith.constant 0 : index
    %c0_8 = arith.constant 0 : index
    %c0_9 = arith.constant 0 : index
    %21 = vector.load %arg4[%c0_7, %c0_8, %c0_9] : memref<3x32x32xf32, #tpu.memory_space<vmem>>, vector<1x32x32xf32>
    %22 = vector.shape_cast %21 : vector<1x32x32xf32> to vector<32x32xf32>
    %cst_10 = arith.constant dense<0.000000e+00> : vector<8x32xf32>
    %23 = tpu.matmul %20, %22, %cst_10 {dimension_numbers = #tpu.dot_dimension_numbers<[1], [0], [0], [1], [0, 0, 1, 1], [], []>} : vector<8x32xf32>, vector<32x32xf32>, vector<8x32xf32> -> vector<8x32xf32>
    %24 = arith.addf %19, %23 : vector<8x32xf32>
    %25 = vector.extract_strided_slice %18 {offsets = [8, 0], sizes = [8, 32], strides = [1, 1]} : vector<24x32xf32> to vector<8x32xf32>
    %c1 = arith.constant 1 : index
    %c0_11 = arith.constant 0 : index
    %c0_12 = arith.constant 0 : index
    %26 = vector.load %arg4[%c1, %c0_11, %c0_12] : memref<3x32x32xf32, #tpu.memory_space<vmem>>, vector<1x32x32xf32>
    %27 = vector.shape_cast %26 : vector<1x32x32xf32> to vector<32x32xf32>
    %cst_13 = arith.constant dense<0.000000e+00> : vector<8x32xf32>
    %28 = tpu.matmul %25, %27, %cst_13 {dimension_numbers = #tpu.dot_dimension_numbers<[1], [0], [0], [1], [0, 0, 1, 1], [], []>} : vector<8x32xf32>, vector<32x32xf32>, vector<8x32xf32> -> vector<8x32xf32>
    %29 = arith.addf %24, %28 : vector<8x32xf32>
    %30 = vector.extract_strided_slice %18 {offsets = [10, 0], sizes = [8, 32], strides = [1, 1]} : vector<24x32xf32> to vector<8x32xf32>
    %c2 = arith.constant 2 : index
    %c0_14 = arith.constant 0 : index
    %c0_15 = arith.constant 0 : index
    %31 = vector.load %arg4[%c2, %c0_14, %c0_15] : memref<3x32x32xf32, #tpu.memory_space<vmem>>, vector<1x32x32xf32>
    %32 = vector.shape_cast %31 : vector<1x32x32xf32> to vector<32x32xf32>
    %cst_16 = arith.constant dense<0.000000e+00> : vector<8x32xf32>
    %33 = tpu.matmul %30, %32, %cst_16 {dimension_numbers = #tpu.dot_dimension_numbers<[1], [0], [0], [1], [0, 0, 1, 1], [], []>} : vector<8x32xf32>, vector<32x32xf32>, vector<8x32xf32> -> vector<8x32xf32>
    %34 = arith.addf %29, %33 : vector<8x32xf32>
    %c0_17 = arith.constant 0 : index
    %c0_18 = arith.constant 0 : index
    %35 = vector.load %arg5[%c0_17, %c0_18] : memref<1x32xf32, #tpu.memory_space<vmem>>, vector<1x32xf32>
    %36 = vector.broadcast %35 : vector<1x32xf32> to vector<8x32xf32>
    %37 = arith.addf %34, %36 : vector<8x32xf32>
    %c0_19 = arith.constant 0 : index
    %c0_20 = arith.constant 0 : index
    %38 = vector.load %arg6[%c0_19, %c0_20] : memref<8x32xf32, #tpu.memory_space<vmem>>, vector<8x32xf32>
    tpu.vector_store %arg6[%c0_19, %c0_20], %37 {strides = array<i32>} : memref<8x32xf32, #tpu.memory_space<vmem>>, vector<8x32xf32>,
    return
  }
  func.func @transform_0(%arg0: i32) -> (i32, i32) {
    %c1_i32 = arith.constant 1 : i32
    %0 = arith.muli %arg0, %c1_i32 : i32
    %c1_i32_0 = arith.constant 1 : i32
    %1 = arith.subi %0, %c1_i32_0 : i32
    %c0_i32 = arith.constant 0 : i32
    %c1_i32_1 = arith.constant 1 : i32
    %2 = arith.maxsi %c0_i32, %1 : i32
    %3 = arith.minsi %c1_i32_1, %2 : i32
    %c0_i32_2 = arith.constant 0 : i32
    %c0_i32_3 = arith.constant 0 : i32
    return %3, %c0_i32_2 : i32, i32
  }
  func.func @transform_1(%arg0: i32) -> (i32, i32) {
    %c1_i32 = arith.constant 1 : i32
    %0 = arith.minsi %arg0, %c1_i32 : i32
    %c0_i32 = arith.constant 0 : i32
    %c0_i32_0 = arith.constant 0 : i32
    return %0, %c0_i32 : i32, i32
  }
  func.func @transform_2(%arg0: i32) -> (i32, i32) {
    %c1_i32 = arith.constant 1 : i32
    %0 = arith.addi %arg0, %c1_i32 : i32
    %c1_i32_0 = arith.constant 1 : i32
    %1 = arith.muli %0, %c1_i32_0 : i32
    %c1_i32_1 = arith.constant 1 : i32
    %2 = arith.minsi %1, %c1_i32_1 : i32
    %c0_i32 = arith.constant 0 : i32
    %c0_i32_2 = arith.constant 0 : i32
    return %2, %c0_i32 : i32, i32
  }
  func.func @transform_3(%arg0: i32) -> (i32, i32, i32) {
    %c0_i32 = arith.constant 0 : i32
    %c0_i32_0 = arith.constant 0 : i32
    %c0_i32_1 = arith.constant 0 : i32
    %c0_i32_2 = arith.constant 0 : i32
    return %c0_i32, %c0_i32_0, %c0_i32_1 : i32, i32, i32
  }
  func.func @transform_4(%arg0: i32) -> (i32, i32) {
    %c0_i32 = arith.constant 0 : i32
    %c0_i32_0 = arith.constant 0 : i32
    %c0_i32_1 = arith.constant 0 : i32
    return %c0_i32, %c0_i32_0 : i32, i32
  }
  func.func @transform_5(%arg0: i32) -> (i32, i32) {
    %c0_i32 = arith.constant 0 : i32
    %c0_i32_0 = arith.constant 0 : i32
    return %arg0, %c0_i32 : i32, i32
  }
}

</mosaic_0001>

<llo_original>
// kernel: tpu_custom_call.1
$region0: #{tpu_custom_call.1}
  #allocation0 [shape = 'u32[]', space=smem, size = 0x4, offset = 0x4, fixed_abs, tag = 'smem constant byte address 0x4 - core index']
  #allocation1 [shape = 'u32[72,128]{1,0:T(1,128)}', space=vmem, size = 0x9000, scoped, tag = 'internal scratch']
  %s0 = inlined_call_operand.hbm [shape: f32[16,32], index: 0, kind: input, shape index: {}]
  %s1 = inlined_call_operand.hbm [shape: f32[16,32], index: 1, kind: input, shape index: {}]
  %s2 = inlined_call_operand.hbm [shape: f32[16,32], index: 2, kind: input, shape index: {}]
  %s3 = inlined_call_operand.hbm [shape: f32[3,32,32], index: 3, kind: input, shape index: {}]
  %s4 = inlined_call_operand.vmem [shape: f32[1,32], index: 4, kind: input, shape index: {}]
  %s5 = inlined_call_operand.hbm [shape: f32[16,32], index: 5, kind: output, shape index: {}]
  %s6 = sld [smem:[#allocation0]]
  $region69: #{tpu_custom_call.1} parent=0
    _
  %s8 = ssub.s32 1, %s6
  %s9 = scalar_select 0, %s8, %s6
  $region1: #{tpu_custom_call.1} parent=0
    #allocation2 [shape = 'u8[8192]{0}', space=vmem, size = 0x2000, scoped, tag = 'input window, operand 0']
    #allocation3 [shape = 's32[2]{0}', space=sflag, size = 0x8, scoped, tag = 'scoped memory for tpu_custom_call.1']
    #allocation4 [shape = 's32[2]{0}', space=sflag, size = 0x8, scoped, tag = 'scoped memory for tpu_custom_call.1']
    #allocation5 [shape = 'u8[8192]{0}', space=vmem, size = 0x2000, scoped, tag = 'input window, operand 1']
    #allocation6 [shape = 's32[2]{0}', space=sflag, size = 0x8, scoped, tag = 'scoped memory for tpu_custom_call.1']
    #allocation7 [shape = 'u8[8192]{0}', space=vmem, size = 0x2000, scoped, tag = 'input window, operand 2']
    #allocation8 [shape = 'u8[49152]{0}', space=vmem, size = 0xc000, scoped, tag = 'input window, operand 3, single buffered']
    #allocation9 [shape = 's32[1]{0}', space=sflag, size = 0x4, scoped, tag = 'scoped memory for tpu_custom_call.1']
    #allocation10 [shape = 'u8[8192]{0}', space=vmem, size = 0x2000, scoped, tag = 'output window, operand 0']
    %10 = vsyncpa [#allocation3], 0
    %s11 = scalar_lea.sflag [#allocation3], 1
    %12 = vsyncpa %s11, 0
    %13 = vsyncpa [#allocation6], 0
    %s14 = scalar_lea.sflag [#allocation6], 1
    %15 = vsyncpa %s14, 0
    %16 = vsyncpa [#allocation9], 0
    %17 = vsyncpa [#allocation4], 0
    %s18 = scalar_lea.sflag [#allocation4], 1
    %19 = vsyncpa %s18, 0
    loop: start=0, step=1, limit=4
    $region2: #{tpu_custom_call.1} parent=1 // loop_pre_header
      _
    $region3: #{tpu_custom_call.1} parent=1 // loop_header
      %s21 = sphi 0, %s25
      %p22 = scmp.ge.s32.totalorder %s21, 4
      %s41 = sphi 0, %s43
      %s44 = sphi 0, %s41
      %s45 = sphi 0, %s44
      %s61 = sphi 0, %s45
      %s71 = sphi 0, %s73
      %s74 = sphi 0, %s71
      %s75 = sphi 0, %s74
      %s91 = sphi 0, %s75
      %s103 = sphi 0, %s105
      %s106 = sphi 0, %s103
      %s107 = sphi 0, %s106
      %s123 = sphi 0, %s107
      %s127 = sphi 0, %s127
      %s129 = sphi 0, %s127
      %s130 = sphi 0, %s129
      %s144 = sphi 0, %s130
      %s148 = sphi 0, %s148
      %s150 = sphi 0, %s148
      %s151 = sphi 0, %s150
      %s165 = sphi 0, %s151
      %s171 = sphi 0, %s173
      %s174 = sphi 0, %s171
      %s175 = sphi 0, %s174
      %s191 = sphi 0, %s175
    $region4: #{tpu_custom_call.1} parent=1 // loop_header_branch
      %24 = sbr.rel (%p22) target = $region8
    $region5: #{tpu_custom_call.1} parent=1 // loop_body
      %s26 = ssub.s32 %s21, 1
      %s27 = ssub.s32 %s21, 2
      %s28 = sadd.s32 %s21, 1
      %s29 = ssub.s32 %s21, 1
      %p30 = scmp.gt.s32.totalorder %s29, 0
      %s31 = scalar_select %p30, %s29, 0
      %p32 = scmp.lt.s32.totalorder %s31, 1
      %s33 = scalar_select %p32, %s31, 1
      %s34 = ssub.s32 %s28, 1
      %p35 = scmp.gt.s32.totalorder %s34, 0
      %s36 = scalar_select %p35, %s34, 0
      %p37 = scmp.lt.s32.totalorder %s36, 1
      %s38 = scalar_select %p37, %s36, 1
      %s39 = ssub.s32 %s33, %s38
      %p40 = scmp.eq.s32.totalorder %s39, 0
      %s42 = sadd.s32 %s41, 1
      %s43 = scalar_select %p40, %s41, %s42
      %p46 = pneg %p40
      %p47 = scmp.eq.s32.totalorder %s21, 1
      %p48 = por %p46, %p47
      %p49 = scmp.ne.s32.totalorder %s41, %s44
      %p50 = scmp.eq.s32.totalorder %s21, 0
      %p51 = por %p49, %p50
      %p52 = scmp.ne.s32.totalorder %s41, %s44
      %p53 = scmp.eq.s32.totalorder %s26, 1
      %p54 = por %p52, %p53
      %p55 = scmp.ne.s32.totalorder %s44, %s45
      %p56 = scmp.eq.s32.totalorder %s26, 0
      %p57 = por %p55, %p56
      %p58 = scmp.ne.s32.totalorder %s44, %s45
      %p59 = scmp.eq.s32.totalorder %s27, 1
      %p60 = por %p58, %p59
      %p62 = scmp.ne.s32.totalorder %s45, %s61
      %p63 = scmp.eq.s32.totalorder %s27, 0
      %p64 = por %p62, %p63
      %p65 = scmp.lt.s32.totalorder %s21, 1
      %s66 = scalar_select %p65, %s21, 1
      %p67 = scmp.lt.s32.totalorder %s28, 1
      %s68 = scalar_select %p67, %s28, 1
      %s69 = ssub.s32 %s66, %s68
      %p70 = scmp.eq.s32.totalorder %s69, 0
      %s72 = sadd.s32 %s71, 1
      %s73 = scalar_select %p70, %s71, %s72
      %p76 = pneg %p70
      %p77 = scmp.eq.s32.totalorder %s21, 1
      %p78 = por %p76, %p77
      %p79 = scmp.ne.s32.totalorder %s71, %s74
      %p80 = scmp.eq.s32.totalorder %s21, 0
      %p81 = por %p79, %p80
      %p82 = scmp.ne.s32.totalorder %s71, %s74
      %p83 = scmp.eq.s32.totalorder %s26, 1
      %p84 = por %p82, %p83
      %p85 = scmp.ne.s32.totalorder %s74, %s75
      %p86 = scmp.eq.s32.totalorder %s26, 0
      %p87 = por %p85, %p86
      %p88 = scmp.ne.s32.totalorder %s74, %s75
      %p89 = scmp.eq.s32.totalorder %s27, 1
      %p90 = por %p88, %p89
      %p92 = scmp.ne.s32.totalorder %s75, %s91
      %p93 = scmp.eq.s32.totalorder %s27, 0
      %p94 = por %p92, %p93
      %s95 = sadd.s32 %s21, 1
      %p96 = scmp.lt.s32.totalorder %s95, 1
      %s97 = scalar_select %p96, %s95, 1
      %s98 = sadd.s32 %s28, 1
      %p99 = scmp.lt.s32.totalorder %s98, 1
      %s100 = scalar_select %p99, %s98, 1
      %s101 = ssub.s32 %s97, %s100
      %p102 = scmp.eq.s32.totalorder %s101, 0
      %s104 = sadd.s32 %s103, 1
      %s105 = scalar_select %p102, %s103, %s104
      %p108 = pneg %p102
      %p109 = scmp.eq.s32.totalorder %s21, 1
      %p110 = por %p108, %p109
      %p111 = scmp.ne.s32.totalorder %s103, %s106
      %p112 = scmp.eq.s32.totalorder %s21, 0
      %p113 = por %p111, %p112
      %p114 = scmp.ne.s32.totalorder %s103, %s106
      %p115 = scmp.eq.s32.totalorder %s26, 1
      %p116 = por %p114, %p115
      %p117 = scmp.ne.s32.totalorder %s106, %s107
      %p118 = scmp.eq.s32.totalorder %s26, 0
      %p119 = por %p117, %p118
      %p120 = scmp.ne.s32.totalorder %s106, %s107
      %p121 = scmp.eq.s32.totalorder %s27, 1
      %p122 = por %p120, %p121
      %p124 = scmp.ne.s32.totalorder %s107, %s123
      %p125 = scmp.eq.s32.totalorder %s27, 0
      %p126 = por %p124, %p125
      %s128 = sadd.s32 %s127, 1
      %p131 = scmp.eq.s32.totalorder %s21, 1
      %p132 = scmp.ne.s32.totalorder %s127, %s129
      %p133 = scmp.eq.s32.totalorder %s21, 0
      %p134 = por %p132, %p133
      %p135 = scmp.ne.s32.totalorder %s127, %s129
      %p136 = scmp.eq.s32.totalorder %s26, 1
      %p137 = por %p135, %p136
      %p138 = scmp.ne.s32.totalorder %s129, %s130
      %p139 = scmp.eq.s32.totalorder %s26, 0
      %p140 = por %p138, %p139
      %p141 = scmp.ne.s32.totalorder %s129, %s130
      %p142 = scmp.eq.s32.totalorder %s27, 1
      %p143 = por %p141, %p142
      %p145 = scmp.ne.s32.totalorder %s130, %s144
      %p146 = scmp.eq.s32.totalorder %s27, 0
      %p147 = por %p145, %p146
      %s149 = sadd.s32 %s148, 1
      %p152 = scmp.eq.s32.totalorder %s21, 1
      %p153 = scmp.ne.s32.totalorder %s148, %s150
      %p154 = scmp.eq.s32.totalorder %s21, 0
      %p155 = por %p153, %p154
      %p156 = scmp.ne.s32.totalorder %s148, %s150
      %p157 = scmp.eq.s32.totalorder %s26, 1
      %p158 = por %p156, %p157
      %p159 = scmp.ne.s32.totalorder %s150, %s151
      %p160 = scmp.eq.s32.totalorder %s26, 0
      %p161 = por %p159, %p160
      %p162 = scmp.ne.s32.totalorder %s150, %s151
      %p163 = scmp.eq.s32.totalorder %s27, 1
      %p164 = por %p162, %p163
      %p166 = scmp.ne.s32.totalorder %s151, %s165
      %p167 = scmp.eq.s32.totalorder %s27, 0
      %p168 = por %p166, %p167
      %s169 = ssub.s32 %s21, %s28
      %p170 = scmp.eq.s32.totalorder %s169, 0
      %s172 = sadd.s32 %s171, 1
      %s173 = scalar_select %p170, %s171, %s172
      %p176 = pneg %p170
      %p177 = scmp.eq.s32.totalorder %s21, 1
      %p178 = por %p176, %p177
      %p179 = scmp.ne.s32.totalorder %s171, %s174
      %p180 = scmp.eq.s32.totalorder %s21, 0
      %p181 = por %p179, %p180
      %p182 = scmp.ne.s32.totalorder %s171, %s174
      %p183 = scmp.eq.s32.totalorder %s26, 1
      %p184 = por %p182, %p183
      %p185 = scmp.ne.s32.totalorder %s174, %s175
      %p186 = scmp.eq.s32.totalorder %s26, 0
      %p187 = por %p185, %p186
      %p188 = scmp.ne.s32.totalorder %s174, %s175
      %p189 = scmp.eq.s32.totalorder %s27, 1
      %p190 = por %p188, %p189
      %p192 = scmp.ne.s32.totalorder %s175, %s191
      %p193 = scmp.eq.s32.totalorder %s27, 0
      %p194 = por %p192, %p193
      %p195 = scmp.le.s32.totalorder 1, %s21
      %p196 = scmp.lt.s32.totalorder %s21, 3
      %p197 = pnand %p195, %p196
      %p198 = pneg %p197
      // Predicated region
      $region9: #{tpu_custom_call.1} parent=5 // pred_check
        _
      $region10: #{tpu_custom_call.1} parent=5 // pred_check_branch
        %200 = sbr.rel (%p197) target = $region12
      $region11: #{tpu_custom_call.1} parent=5 // pred_region
        %s201 = ssub.s32 %s21, 1
        // Predicated region
        $region13: #{tpu_custom_call.1} parent=11 // pred_check
          %p202 = pneg %p140
        $region14: #{tpu_custom_call.1} parent=11 // pred_check_branch
          %204 = sbr.rel (%p202) target = $region16
        $region15: #{tpu_custom_call.1} parent=11 // pred_region
          %206 = vsyncadd [#allocation9], 0
          %s207 = sshll.u32 %s3, 4
          %s208 = int_to_ptr.hbm [resolvable:$true] %s207
          %s209 = sshll.u32 [#allocation8], 4
          %s210 = int_to_ptr.vmem [resolvable:$true] %s209
          %215 = dma.hbm_to_vmem [thread:$0]  %s208, 1536, %s210, [#allocation9], 128, 128, 8
        $region16: #{tpu_custom_call.1} parent=11 // pred_fallthru
          _
        // Predicated region
        $region17: #{tpu_custom_call.1} parent=11 // pred_check
          %p216 = pneg %p161
        $region18: #{tpu_custom_call.1} parent=11 // pred_check_branch
          %218 = sbr.rel (%p216) target = $region20
        $region19: #{tpu_custom_call.1} parent=11 // pred_region
          _
        $region20: #{tpu_custom_call.1} parent=11 // pred_fallthru
          _
      $region12: #{tpu_custom_call.1} parent=5 // pred_fallthru
        _
      %p219 = scmp.lt.s32.totalorder %s21, 2
      // Predicated region
      $region21: #{tpu_custom_call.1} parent=5 // pred_check
        %p220 = pneg %p219
      $region22: #{tpu_custom_call.1} parent=5 // pred_check_branch
        %222 = sbr.rel (%p220) target = $region24
      $region23: #{tpu_custom_call.1} parent=5 // pred_region
        // Predicated region
        $region25: #{tpu_custom_call.1} parent=23 // pred_check
          %p223 = pneg %p51
        $region26: #{tpu_custom_call.1} parent=23 // pred_check_branch
          %225 = sbr.rel (%p223) target = $region28
        $region27: #{tpu_custom_call.1} parent=23 // pred_region
          %s226 = sand.u32 %s41, 1
          %s227 = scalar_lea.sflag [#allocation3], %s226
          %s228 = sand.u32 %s41, 1
          %s229 = smul.addr %s228, 8
          %s230 = scalar_lea.vmem [#allocation2], %s229
          %s231 = ssub.s32 %s21, 1
          %p232 = scmp.gt.s32.totalorder %s231, 0
          %s233 = scalar_select %p232, %s231, 0
          %p234 = scmp.lt.s32.totalorder %s233, 1
          %s235 = scalar_select %p234, %s233, 1
          %237 = vsyncadd %s227, 0
          %s238 = smul.addr %s235, 8
          %s239 = scalar_lea.hbm %s0, %s238
          %s241 = sshll.u32 %s239, 4
          %s242 = int_to_ptr.hbm [resolvable:$true] %s241
          %s243 = sshll.u32 %s230, 4
          %s244 = int_to_ptr.vmem [resolvable:$true] %s243
          %246 = dma.hbm_to_vmem [thread:$0]  %s242, 128, %s244, %s227
        $region28: #{tpu_custom_call.1} parent=23 // pred_fallthru
          _
        // Predicated region
        $region29: #{tpu_custom_call.1} parent=23 // pred_check
          %p247 = pneg %p81
        $region30: #{tpu_custom_call.1} parent=23 // pred_check_branch
          %249 = sbr.rel (%p247) target = $region32
        $region31: #{tpu_custom_call.1} parent=23 // pred_region
          %s250 = sand.u32 %s21, 1
          %s251 = scalar_lea.sflag [#allocation6], %s250
          %s252 = sand.u32 %s71, 1
          %s253 = smul.addr %s252, 8
          %s254 = scalar_lea.vmem [#allocation5], %s253
          %p255 = scmp.lt.s32.totalorder %s21, 1
          %s256 = scalar_select %p255, %s21, 1
          %258 = vsyncadd %s251, 0
          %s259 = smul.addr %s256, 8
          %s260 = scalar_lea.hbm %s1, %s259
          %s262 = sshll.u32 %s260, 4
          %s263 = int_to_ptr.hbm [resolvable:$true] %s262
          %s264 = sshll.u32 %s254, 4
          %s265 = int_to_ptr.vmem [resolvable:$true] %s264
          %267 = dma.hbm_to_vmem [thread:$0]  %s263, 128, %s265, %s251
        $region32: #{tpu_custom_call.1} parent=23 // pred_fallthru
          _
        // Predicated region
        $region33: #{tpu_custom_call.1} parent=23 // pred_check
          %p268 = pneg %p113
        $region34: #{tpu_custom_call.1} parent=23 // pred_check_branch
          %270 = sbr.rel (%p268) target = $region36
        $region35: #{tpu_custom_call.1} parent=23 // pred_region
          %s271 = sand.u32 %s21, 1
          %s272 = scalar_lea.sflag [#allocation6], %s271
          %s273 = sand.u32 %s103, 1
          %s274 = smul.addr %s273, 8
          %s275 = scalar_lea.vmem [#allocation7], %s274
          %s276 = sadd.s32 %s21, 1
          %p277 = scmp.lt.s32.totalorder %s276, 1
          %s278 = scalar_select %p277, %s276, 1
          %280 = vsyncadd %s272, 0
          %s281 = smul.addr %s278, 8
          %s282 = scalar_lea.hbm %s2, %s281
          %s284 = sshll.u32 %s282, 4
          %s285 = int_to_ptr.hbm [resolvable:$true] %s284
          %s286 = sshll.u32 %s275, 4
          %s287 = int_to_ptr.vmem [resolvable:$true] %s286
          %289 = dma.hbm_to_vmem [thread:$0]  %s285, 128, %s287, %s272
        $region36: #{tpu_custom_call.1} parent=23 // pred_fallthru
          _
      $region24: #{tpu_custom_call.1} parent=5 // pred_fallthru
        _
      %p290 = scmp.le.s32.totalorder 1, %s21
      %p291 = scmp.lt.s32.totalorder %s21, 3
      %p292 = pnand %p290, %p291
      %p293 = pneg %p292
      // Predicated region
      $region37: #{tpu_custom_call.1} parent=5 // pred_check
        _
      $region38: #{tpu_custom_call.1} parent=5 // pred_check_branch
        %295 = sbr.rel (%p292) target = $region40
      $region39: #{tpu_custom_call.1} parent=5 // pred_region
        %s296 = ssub.s32 %s21, 1
        %s297 = sand.u32 %s44, 1
        %s298 = scalar_lea.sflag [#allocation3], %s297
        %s299 = sand.u32 %s44, 1
        %s300 = smul.addr %s299, 8
        %s301 = scalar_lea.vmem [#allocation2], %s300
        // Predicated region
        $region41: #{tpu_custom_call.1} parent=39 // pred_check
          %p302 = pneg %p57
        $region42: #{tpu_custom_call.1} parent=39 // pred_check_branch
          %304 = sbr.rel (%p302) target = $region44
        $region43: #{tpu_custom_call.1} parent=39 // pred_region
          %306 = dma.done %s298, 128
        $region44: #{tpu_custom_call.1} parent=39 // pred_fallthru
          _
        %s307 = sand.u32 %s26, 1
        %s308 = scalar_lea.sflag [#allocation6], %s307
        %s309 = sand.u32 %s74, 1
        %s310 = smul.addr %s309, 8
        %s311 = scalar_lea.vmem [#allocation5], %s310
        // Predicated region
        $region45: #{tpu_custom_call.1} parent=39 // pred_check
          %p312 = pneg %p87
        $region46: #{tpu_custom_call.1} parent=39 // pred_check_branch
          %314 = sbr.rel (%p312) target = $region48
        $region47: #{tpu_custom_call.1} parent=39 // pred_region
          %316 = dma.done %s308, 128
        $region48: #{tpu_custom_call.1} parent=39 // pred_fallthru
          _
        %s317 = sand.u32 %s26, 1
        %s318 = scalar_lea.sflag [#allocation6], %s317
        %s319 = sand.u32 %s106, 1
        %s320 = smul.addr %s319, 8
        %s321 = scalar_lea.vmem [#allocation7], %s320
        // Predicated region
        $region49: #{tpu_custom_call.1} parent=39 // pred_check
          %p322 = pneg %p119
        $region50: #{tpu_custom_call.1} parent=39 // pred_check_branch
          %324 = sbr.rel (%p322) target = $region52
        $region51: #{tpu_custom_call.1} parent=39 // pred_region
          %326 = dma.done %s318, 128
        $region52: #{tpu_custom_call.1} parent=39 // pred_fallthru
          _
        // Predicated region
        $region53: #{tpu_custom_call.1} parent=39 // pred_check
          %p327 = pneg %p140
        $region54: #{tpu_custom_call.1} parent=39 // pred_check_branch
          %329 = sbr.rel (%p327) target = $region56
        $region55: #{tpu_custom_call.1} parent=39 // pred_region
          %331 = dma.done [#allocation9], 1536
        $region56: #{tpu_custom_call.1} parent=39 // pred_fallthru
          _
        %s332 = sand.u32 %s44, 1
        %s333 = scalar_lea.sflag [#allocation3], %s332
        %s334 = sand.u32 %s44, 1
        %s335 = smul.addr %s334, 8
        %s336 = scalar_lea.vmem [#allocation2], %s335
        %p337 = pneg %p57
        %p338 = pneg %p54
        %s339 = sand.u32 %s26, 1
        %s340 = scalar_lea.sflag [#allocation6], %s339
        %s341 = sand.u32 %s74, 1
        %s342 = smul.addr %s341, 8
        %s343 = scalar_lea.vmem [#allocation5], %s342
        %p344 = pneg %p87
        %p345 = pneg %p84
        %s346 = sand.u32 %s26, 1
        %s347 = scalar_lea.sflag [#allocation6], %s346
        %s348 = sand.u32 %s106, 1
        %s349 = smul.addr %s348, 8
        %s350 = scalar_lea.vmem [#allocation7], %s349
        %p351 = pneg %p119
        %p352 = pneg %p116
        %p353 = pneg %p140
        %p354 = pneg %p137
        %p355 = pneg %p161
        %p356 = pneg %p158
        %p357 = pneg %p187
        %p358 = pneg %p184
        %s359 = sand.u32 %s174, 1
        %s360 = scalar_lea.sflag [#allocation4], %s359
        %s361 = sand.u32 %s174, 1
        %s362 = smul.addr %s361, 8
        %s363 = scalar_lea.vmem [#allocation10], %s362
        %s364 = ssub.s32 %s26, 1
        %p365 = scmp.gt.s32.totalorder %s364, 0
        %s366 = scalar_select %p365, %s364, 0
        %p367 = scmp.lt.s32.totalorder %s366, 1
        %s368 = scalar_select %p367, %s366, 1
        %p369 = scmp.lt.s32.totalorder %s26, 1
        %s370 = scalar_select %p369, %s26, 1
        %s371 = sadd.s32 %s26, 1
        %p372 = scmp.lt.s32.totalorder %s371, 1
        %s373 = scalar_select %p372, %s371, 1
        %v374 = vld [vmem:[%s301] sm:$0xff]
        %v375 = vld [vmem:[%s311] sm:$0xff]
        %v376 = vld [vmem:[%s321] sm:$0xff]
        %s377 = smul.u32 %s26, 8
        %s378 = ssub.s32 %s377, 8
        %v379 = vlaneseq
        %v380 = vshrl.u32 %v379, 7
        %v381 = vadd.s32 %v380, 8
        %v382 = vadd.s32 %v380, 16
        %v383 = vstv %s378
        %v384 = vadd.s32 %v383, %v380
        %v385 = vadd.s32 %v383, %v381
        %v386 = vadd.s32 %v383, %v382
        %vm387 = vcmp.ge.s32.totalorder %v384, 0
        %vm388 = vcmp.ge.s32.totalorder %v385, 0
        %vm389 = vcmp.ge.s32.totalorder %v386, 0
        %vm390 = vcmp.lt.s32.totalorder %v384, 16
        %vm391 = vcmp.lt.s32.totalorder %v385, 16
        %vm392 = vcmp.lt.s32.totalorder %v386, 16
        %vm393 = vmand %vm387, %vm390
        %vm394 = vmand %vm388, %vm391
        %vm395 = vmand %vm389, %vm392
        %v396 = vsel %vm393, 1, 0
        %v397 = vsel %vm394, 1, 0
        %v398 = vsel %vm395, 1, 0
        %vm399 = vcmp.eq.s32.totalorder %v396, 1
        %vm400 = vcmp.eq.s32.totalorder %v397, 1
        %vm401 = vcmp.eq.s32.totalorder %v398, 1
        %v402 = vsel %vm399, %v374, 0.0
        %v403 = vsel %vm400, %v375, 0.0
        %v404 = vsel %vm401, %v376, 0.0
        %v405 = vld [vmem:[#allocation8] sm:$0xff]
        %v406 = vld [vmem:[#allocation8 + $0x8] sm:$0xff]
        %v407 = vld [vmem:[#allocation8 + $0x10] sm:$0xff]
        %v408 = vld [vmem:[#allocation8 + $0x18] sm:$0xff]
        %s409 = scalar_lea.vmem [#allocation8], 32
        %v410 = vld [vmem:[%s409] sm:$0xff]
        %v411 = vld [vmem:[%s409 + $0x8] sm:$0xff]
        %v412 = vld [vmem:[%s409 + $0x10] sm:$0xff]
        %v413 = vld [vmem:[%s409 + $0x18] sm:$0xff]
        %vm414 = vcmask 261120
        %v416 = vsel %vm414, %v403, 0
        %418 = vmatpush.msra.mxu0 0.0
        %419 = vmatpush.msra.mxu0 0.0
        %420 = vmatpush.msra.mxu0 0.0
        %421 = vmatpush.msra.mxu0 0.0
        %422 = vmatpush.msra.mxu0 0.0
        %423 = vmatpush.msra.mxu0 0.0
        %424 = vmatpush.msra.mxu0 0.0
        %425 = vmatpush.msra.mxu0 0.0
        %426 = vmatpush.msra.mxu0 0.0
        %427 = vmatpush.msra.mxu0 0.0
        %428 = vmatpush.msra.mxu0 0.0
        %429 = vmatpush.msra.mxu0 0.0
        %430 = vmatpush.msra.mxu0 %v413
        %431 = vmatpush.msra.mxu0 %v412
        %432 = vmatpush.msra.mxu0 %v411
        %433 = vmatpush.msra.mxu0 %v410
        %434 = vmatmul.f32.gmra.mxu0 %v416
        %v435 = vpop.f32.mrf.mxu0
        %v436 = vadd.f32 0.0, %v435
        %437 = vdwg.mxu0
        %vm439 = vcmask 1041408
        %v440 = vrot.slane %v402, 6
        %v441 = vrot.slane %v403, 6
        %v442 = vsel %vm439, %v440, %v441
        %v443 = vsel %vm414, %v442, 0
        %445 = vmatpush.msra.mxu0 0.0
        %446 = vmatpush.msra.mxu0 0.0
        %447 = vmatpush.msra.mxu0 0.0
        %448 = vmatpush.msra.mxu0 0.0
        %449 = vmatpush.msra.mxu0 0.0
        %450 = vmatpush.msra.mxu0 0.0
        %451 = vmatpush.msra.mxu0 0.0
        %452 = vmatpush.msra.mxu0 0.0
        %453 = vmatpush.msra.mxu0 0.0
        %454 = vmatpush.msra.mxu0 0.0
        %455 = vmatpush.msra.mxu0 0.0
        %456 = vmatpush.msra.mxu0 0.0
        %457 = vmatpush.msra.mxu0 %v408
        %458 = vmatpush.msra.mxu0 %v407
        %459 = vmatpush.msra.mxu0 %v406
        %460 = vmatpush.msra.mxu0 %v405
        %461 = vmatmul.f32.gmra.mxu0 %v443
        %v462 = vpop.f32.mrf.mxu0
        %v463 = vadd.f32 %v436, %v462
        %464 = vdwg.mxu0
        %s465 = scalar_lea.vmem [#allocation8], 64
        %v466 = vld [vmem:[%s465] sm:$0xff]
        %v467 = vld [vmem:[%s465 + $0x8] sm:$0xff]
        %v468 = vld [vmem:[%s465 + $0x10] sm:$0xff]
        %v469 = vld [vmem:[%s465 + $0x18] sm:$0xff]
        %vm471 = vcmask 1045504
        %v472 = vrot.slane %v403, 2
        %v473 = vrot.slane %v404, 2
        %v474 = vsel %vm471, %v472, %v473
        %v475 = vsel %vm414, %v474, 0
        %477 = vmatpush.msra.mxu0 0.0
        %478 = vmatpush.msra.mxu0 0.0
        %479 = vmatpush.msra.mxu0 0.0
        %480 = vmatpush.msra.mxu0 0.0
        %481 = vmatpush.msra.mxu0 0.0
        %482 = vmatpush.msra.mxu0 0.0
        %483 = vmatpush.msra.mxu0 0.0
        %484 = vmatpush.msra.mxu0 0.0
        %485 = vmatpush.msra.mxu0 0.0
        %486 = vmatpush.msra.mxu0 0.0
        %487 = vmatpush.msra.mxu0 0.0
        %488 = vmatpush.msra.mxu0 0.0
        %489 = vmatpush.msra.mxu0 %v469
        %490 = vmatpush.msra.mxu0 %v468
        %491 = vmatpush.msra.mxu0 %v467
        %492 = vmatpush.msra.mxu0 %v466
        %493 = vmatmul.f32.gmra.mxu0 %v475
        %v494 = vpop.f32.mrf.mxu0
        %v495 = vadd.f32 0.0, %v494
        %496 = vdwg.mxu0
        %v497 = vadd.f32 %v463, %v495
        %v498 = vld [vmem:[%s4] sm:$0x1]
        %v500 = vperm.slane %v498, 0
        %v502 = vadd.f32 %v497, %v500
        %503 = vst.msk [vmem:[%s363] sm:$0xff] %vm414, %v502
        %s504 = sand.u32 %s174, 1
        %s505 = scalar_lea.sflag [#allocation4], %s504
        %s506 = sand.u32 %s174, 1
        %s507 = smul.addr %s506, 8
        %s508 = scalar_lea.vmem [#allocation10], %s507
        // Predicated region
        $region57: #{tpu_custom_call.1} parent=39 // pred_check
          %p509 = pneg %p184
        $region58: #{tpu_custom_call.1} parent=39 // pred_check_branch
          %511 = sbr.rel (%p509) target = $region60
        $region59: #{tpu_custom_call.1} parent=39 // pred_region
          %513 = vsyncadd %s505, 0
          %s514 = smul.addr %s26, 8
          %s515 = scalar_lea.hbm %s5, %s514
          %s517 = sshll.u32 %s508, 4
          %s518 = int_to_ptr.vmem [resolvable:$true] %s517
          %s519 = sshll.u32 %s515, 4
          %s520 = int_to_ptr.hbm [resolvable:$true] %s519
          %522 = dma.vmem_to_hbm [thread:$0]  %s518, 128, %s520, %s505
        $region60: #{tpu_custom_call.1} parent=39 // pred_fallthru
          _
      $region40: #{tpu_custom_call.1} parent=5 // pred_fallthru
        _
      %p523 = scmp.le.s32.totalorder 2, %s21
      // Predicated region
      $region61: #{tpu_custom_call.1} parent=5 // pred_check
        %p524 = pneg %p523
      $region62: #{tpu_custom_call.1} parent=5 // pred_check_branch
        %526 = sbr.rel (%p524) target = $region64
      $region63: #{tpu_custom_call.1} parent=5 // pred_region
        %s527 = ssub.s32 %s21, 2
        // Predicated region
        $region65: #{tpu_custom_call.1} parent=63 // pred_check
          %p528 = pneg %p190
        $region66: #{tpu_custom_call.1} parent=63 // pred_check_branch
          %530 = sbr.rel (%p528) target = $region68
        $region67: #{tpu_custom_call.1} parent=63 // pred_region
          %s531 = sand.u32 %s175, 1
          %s532 = scalar_lea.sflag [#allocation4], %s531
          %s533 = sand.u32 %s175, 1
          %s534 = smul.addr %s533, 8
          %s535 = scalar_lea.vmem [#allocation10], %s534
          %537 = dma.done %s532, 128
        $region68: #{tpu_custom_call.1} parent=63 // pred_fallthru
          _
      $region64: #{tpu_custom_call.1} parent=5 // pred_fallthru
        _
    $region6: #{tpu_custom_call.1} parent=1 // loop_footer
      %s25 = sadd.s32 1, %s21
    $region7: #{tpu_custom_call.1} parent=1 // loop_footer_branch
      %20 = sbr.rel target = $region3
    $region8: #{tpu_custom_call.1} parent=1 // loop_exit
      _
    %538 = vsyncpa [#allocation3], 1
    %s539 = scalar_lea.sflag [#allocation3], 1
    %540 = vsyncpa %s539, 1
    %541 = vsyncpa [#allocation6], 1
    %s542 = scalar_lea.sflag [#allocation6], 1
    %543 = vsyncpa %s542, 1
    %544 = vsyncpa [#allocation9], 1
    %545 = vsyncpa [#allocation4], 1
    %s546 = scalar_lea.sflag [#allocation4], 1
    %547 = vsyncpa %s546, 1

</llo_original>
